<compile_context>
chip_gen: v5e
topology: v5e:2x2
jax: 0.10.0
libtpu: 0.0.40
codegen_flags: <defaults>
</compile_context>

<pallas_src>
import functools

import jax
import jax.numpy as jnp
from jax import lax
from jax.experimental import pallas as pl
from jax.experimental.pallas import tpu as pltpu


# ----------------------------------------------------------------------------
# helpers
# ----------------------------------------------------------------------------
def _vmem_limit_bytes():
    """<= half of physical VMEM (v5e/v6e: 128 MiB, v7x: 64 MiB per TC)."""
    try:
        return int(min(pltpu.get_tpu_info().vmem_capacity_bytes // 2,
                       64 * 1024 * 1024))
    except Exception:  # pragma: no cover - conservative fallback
        return 32 * 1024 * 1024


def _row_tile(dim, target, align=8):
    """Largest legal tile <= target: full dim if it fits, else align-multiple."""
    if dim <= target:
        return dim
    return max(align, (target // align) * align)


def _k_tile(cin, target):
    """Largest K tile <= target that divides cin EXACTLY.  The reduction dim
    must never be padded: padded-K garbage would leak into valid outputs."""
    if cin <= target:
        return cin
    for t in range((target // 128) * 128, 127, -128):
        if cin % t == 0:
            return t
    return cin  # no aligned divisor -> keep K un-tiled (always correct)


# ----------------------------------------------------------------------------
# Linear projection: y = x @ w.T + b   (K-tiled, f32 accumulator)
# ----------------------------------------------------------------------------
def _linear_kernel(x_ref, wt_ref, b_ref, o_ref, acc_ref):
    @pl.when(pl.program_id(2) == 0)
    def _():
        acc_ref[...] = jnp.zeros_like(acc_ref)

    acc_ref[...] += jnp.dot(x_ref[...], wt_ref[...],
                            preferred_element_type=jnp.float32)

    @pl.when(pl.program_id(2) == pl.num_programs(2) - 1)
    def _():
        o_ref[...] = (acc_ref[...] + b_ref[...]).astype(o_ref.dtype)


def linear_pallas(x2d, w, b, *, tm_target=512, tn_target=256, tk_target=512,
                  compute_dtype=None):
    """PyTorch nn.Linear semantics, tiled over (M, Cout, Cin)."""
    M, Cin = x2d.shape
    Cout = w.shape[0]
    out_dtype = x2d.dtype
    wt = jnp.transpose(w)                  # one-time layout fix, outside kernel
    if compute_dtype is not None:          # optional bf16 MXU path (gated)
        x2d = x2d.astype(compute_dtype)
        wt = wt.astype(compute_dtype)
    tm = _row_tile(M, tm_target)
    tn = Cout if Cout <= tn_target else max(128, (tn_target // 128) * 128)
    tk = _k_tile(Cin, tk_target)
    grid = (pl.cdiv(M, tm), pl.cdiv(Cout, tn), Cin // tk)
    return pl.pallas_call(
        _linear_kernel,
        out_shape=jax.ShapeDtypeStruct((M, Cout), out_dtype),
        grid=grid,
        in_specs=[
            pl.BlockSpec((tm, tk), lambda i, j, k: (i, k)),
            pl.BlockSpec((tk, tn), lambda i, j, k: (k, j)),
            pl.BlockSpec((1, tn), lambda i, j, k: (0, j)),
        ],
        out_specs=pl.BlockSpec((tm, tn), lambda i, j, k: (i, j)),
        scratch_shapes=[pltpu.VMEM((tm, tn), jnp.float32)],
        compiler_params=pltpu.CompilerParams(
            dimension_semantics=("parallel", "parallel", "arbitrary"),
            vmem_limit_bytes=_vmem_limit_bytes(),
        ),
    )(x2d, wt, b.reshape(1, Cout))


# ----------------------------------------------------------------------------
# Fused window attention: reads windows straight from qkv [B, Lp, 3C] (manual
# double-buffered DMA), computes all heads, writes the final pre-projection
# layout [B, nw*W, C] with lane-dense stores.
# ----------------------------------------------------------------------------
def _window_attn_kernel(qkv_hbm, o_ref, buf, sem, *, W, step, C, H, Dh, scale):
    b = pl.program_id(0)
    n = pl.program_id(1)
    nw = pl.num_programs(1)

    def issue(row, start, slot):
        pltpu.make_async_copy(qkv_hbm.at[row, pl.ds(start, W)],
                              buf.at[slot], sem.at[slot]).start()

    # prime the pipeline at the first window of every batch row
    @pl.when(n == 0)
    def _():
        issue(b, 0, 0)

    slot = n & 1

    # wait for the current window's qkv rows (same-shaped descriptor)
    pltpu.make_async_copy(qkv_hbm.at[b, pl.ds(0, W)],
                          buf.at[slot], sem.at[slot]).wait()

    # prefetch the next window of this batch row (overlap DMA with compute)
    @pl.when(n + 1 < nw)
    def _():
        issue(b, (n + 1) * step, 1 - slot)

    win = buf.at[slot]                                       # [W, 3C] view
    for h in range(H):
        q = win[:, h * Dh:(h + 1) * Dh]                      # [W, Dh]
        k = win[:, C + h * Dh:C + (h + 1) * Dh]              # [W, Dh]
        v = win[:, 2 * C + h * Dh:2 * C + (h + 1) * Dh]      # [W, Dh]
        # torch unfold puts the window axis last: q/k are [Dh, W], so
        # attn = q @ k^T contracts over W and is a [Dh, Dh] matrix.
        s = lax.dot_general(q, k, (((0,), (0,)), ((), ())),
                            preferred_element_type=jnp.float32) * scale
        s = s - jnp.max(s, axis=-1, keepdims=True)
        p = jnp.exp(s)
        p = p * pl.reciprocal(jnp.sum(p, axis=-1, keepdims=True), approx=False)
        o = lax.dot_general(p.astype(v.dtype), v, (((1,), (1,)), ((), ())),
                            preferred_element_type=jnp.float32)   # [Dh, W]
        # Faithful to torch's `.reshape(B, H, -1, Dh)`: each window's [Dh, W]
        # tile is flat re-chunked into W rows of Dh (intentional Dh/W mixing,
        # identical to the PyTorch module -- not a bug).
        o = o.reshape(W, Dh)
        o_ref[:, :, h * Dh:(h + 1) * Dh] = o[None].astype(o_ref.dtype)


def window_attention_pallas(qkv, *, B, nw, W, step, H, Dh, scale):
    """qkv: [B, Lp, 3C].  Computes the first `nw` windows and returns the
    attention output already in the final [B, nw*W, C] layout."""
    C = H * Dh
    return pl.pallas_call(
        functools.partial(_window_attn_kernel, W=W, step=step, C=C, H=H,
                          Dh=Dh, scale=scale),
        out_shape=jax.ShapeDtypeStruct((B, nw * W, C), qkv.dtype),
        grid=(B, nw),
        in_specs=[pl.BlockSpec(memory_space=pl.ANY)],     # raw HBM, manual DMA
        out_specs=pl.BlockSpec((1, W, C), lambda b, n: (b, n, 0)),
        scratch_shapes=[
            pltpu.VMEM((2, W, 3 * C), qkv.dtype),         # double-buffered window
            pltpu.SemaphoreType.DMA((2,)),
        ],
        compiler_params=pltpu.CompilerParams(
            dimension_semantics=("parallel", "arbitrary"),
            vmem_limit_bytes=_vmem_limit_bytes(),
        ),
    )(qkv)


# ----------------------------------------------------------------------------
# Module forward (glue in plain JAX, compute in Pallas)
# ----------------------------------------------------------------------------
def enhanced_local_attention_forward(x, params, *, num_heads, window_size,
                                     bidirectional=True, projection_dtype=None):
    B, L, C = x.shape
    H = num_heads
    Dh = C // H
    W = window_size
    scale = Dh ** (-0.5)

    # pad sequence to a multiple of window_size (F.pad)
    pad_l = (W - L % W) % W
    x_pad = jnp.pad(x, ((0, 0), (0, pad_l), (0, 0)))
    Lp = L + pad_l

    # qkv projection (K-tiled Pallas matmul).  Output kept as [B, Lp, 3C];
    # no (2,0,3,1,4) transpose -- the attention kernel slices heads itself.
    qkv = linear_pallas(x_pad.reshape(B * Lp, C), params["w_qkv"],
                        params["b_qkv"], compute_dtype=projection_dtype)
    qkv = qkv.reshape(B, Lp, 3 * C)

    step = W // 2 if bidirectional else W
    nw = (Lp - W) // step + 1            # windows torch's unfold would create
    # Windows whose output rows land at or beyond L are discarded by the final
    # [:, :L] slice, so skip them entirely (~half the work when bidirectional).
    nw_keep = min(nw, pl.cdiv(L, W))

    attn = window_attention_pallas(qkv, B=B, nw=nw_keep, W=W, step=step,
                                   H=H, Dh=Dh, scale=scale)  # [B, nw_keep*W, C]

    # slice to L BEFORE the output projection (row-wise op -> identical result)
    attn = attn[:, :L]

    out = linear_pallas(attn.reshape(B * L, C), params["w_out"],
                        params["b_out"], compute_dtype=projection_dtype)
    # nn.Dropout is identity in eval mode.
    return out.reshape(B, L, C)


# ----------------------------------------------------------------------------
# Pure-JAX reference (mirrors the PyTorch code) for a sanity check
# ----------------------------------------------------------------------------
def reference_forward(x, params, *, num_heads, window_size, bidirectional=True):
    B, L, C = x.shape
    Dh = C // num_heads
    W = window_size
    pad_l = (W - L % W) % W
    xp = jnp.pad(x, ((0, 0), (0, pad_l), (0, 0)))
    Lp = L + pad_l
    qkv = xp @ params["w_qkv"].T + params["b_qkv"]
    qkv = qkv.reshape(B, Lp, 3, num_heads, Dh).transpose(2, 0, 3, 1, 4)
    q, k, v = qkv[0], qkv[1], qkv[2]
    step = W // 2 if bidirectional else W
    nw = (Lp - W) // step + 1
    idx = jnp.arange(nw)[:, None] * step + jnp.arange(W)[None, :]
    uf = lambda t: jnp.transpose(t[:, :, idx, :], (0, 1, 2, 4, 3))  # [B,H,nw,Dh,W]
    q, k, v = uf(q), uf(k), uf(v)
    attn = jnp.einsum("bhndw,bhnew->bhnde", q, k) * Dh ** (-0.5)
    attn = jax.nn.softmax(attn, axis=-1)
    o = jnp.einsum("bhnde,bhnew->bhndw", attn, v)
    o = o.reshape(B, num_heads, -1, Dh).transpose(0, 2, 1, 3).reshape(B, -1, C)
    o = o @ params["w_out"].T + params["b_out"]
    return o[:, :L]


# ----------------------------------------------------------------------------
if __name__ == "__main__":
    # small shapes consistent with the module
    B, L, C = 2, 16, 32
    num_heads = 4
    window_size = 8

    key = jax.random.PRNGKey(0)
    k_x, k_wq, k_bq, k_wo, k_bo = jax.random.split(key, 5)

    x = jax.random.normal(k_x, (B, L, C), dtype=jnp.float32)
    params = {
        "w_qkv": jax.random.normal(k_wq, (3 * C, C), dtype=jnp.float32) * 0.05,
        "b_qkv": jax.random.normal(k_bq, (3 * C,), dtype=jnp.float32) * 0.05,
        "w_out": jax.random.normal(k_wo, (C, C), dtype=jnp.float32) * 0.05,
        "b_out": jax.random.normal(k_bo, (C,), dtype=jnp.float32) * 0.05,
    }

    ok = True
    for bidir in (True, False):
        y = enhanced_local_attention_forward(
            x, params, num_heads=num_heads, window_size=window_size,
            bidirectional=bidir)
        y = jax.block_until_ready(y)
        y_ref = reference_forward(
            x, params, num_heads=num_heads, window_size=window_size,
            bidirectional=bidir)
        assert y.shape == (B, L, C), y.shape
        ok = ok and bool(jnp.allclose(y, y_ref, atol=1e-4, rtol=1e-4))

    assert ok, "mismatch vs reference"
    print("KERNEL_OK")
</pallas_src>

<mosaic_0001>
module attributes {stable_mosaic.version = 11 : i64} {
  func.func @_linear_kernel(%arg0: i32, %arg1: i32, %arg2: i32, %arg3: memref<32x32xf32, #tpu.memory_space<vmem>>, %arg4: memref<32x96xf32, #tpu.memory_space<vmem>>, %arg5: memref<1x96xf32, #tpu.memory_space<vmem>>, %arg6: memref<32x96xf32, #tpu.memory_space<vmem>>, %arg7: memref<32x96xf32, #tpu.memory_space<vmem>>) attributes {dimension_semantics = [#tpu.dimension_semantics<parallel>, #tpu.dimension_semantics<parallel>, #tpu.dimension_semantics<arbitrary>], iteration_bounds = array<i64: 1, 1, 1>, scalar_prefetch = 0 : i64, scratch_operands = 1 : i64, tpu.core_type = #tpu.core_type<tc>, window_params = [{transform_indices = @transform_0, window_bounds = array<i64: 32, 32>}, {transform_indices = @transform_1, window_bounds = array<i64: 32, 96>}, {transform_indices = @transform_2, window_bounds = array<i64: 1, 96>}, {transform_indices = @transform_3, window_bounds = array<i64: 32, 96>}]} {
    %c0_i32 = arith.constant 0 : i32
    %0 = arith.cmpi eq, %arg2, %c0_i32 : i32
    %1 = arith.extui %0 : i1 to i32
    %c0_i32_0 = arith.constant 0 : i32
    %2 = arith.cmpi ne, %1, %c0_i32_0 : i32
    scf.if %2 {
      %cst_10 = arith.constant 0.000000e+00 : f32
      %12 = vector.broadcast %cst_10 : f32 to vector<32x96xf32>
      %c0_11 = arith.constant 0 : index
      %c0_12 = arith.constant 0 : index
      %13 = vector.load %arg7[%c0_11, %c0_12] : memref<32x96xf32, #tpu.memory_space<vmem>>, vector<32x96xf32>
      tpu.vector_store %arg7[%c0_11, %c0_12], %12 {strides = array<i32>} : memref<32x96xf32, #tpu.memory_space<vmem>>, vector<32x96xf32>,
    } else {
    }
    %c0 = arith.constant 0 : index
    %c0_1 = arith.constant 0 : index
    %3 = vector.load %arg7[%c0, %c0_1] : memref<32x96xf32, #tpu.memory_space<vmem>>, vector<32x96xf32>
    %c0_2 = arith.constant 0 : index
    %c0_3 = arith.constant 0 : index
    %4 = vector.load %arg3[%c0_2, %c0_3] : memref<32x32xf32, #tpu.memory_space<vmem>>, vector<32x32xf32>
    %c0_4 = arith.constant 0 : index
    %c0_5 = arith.constant 0 : index
    %5 = vector.load %arg4[%c0_4, %c0_5] : memref<32x96xf32, #tpu.memory_space<vmem>>, vector<32x96xf32>
    %cst = arith.constant dense<0.000000e+00> : vector<32x96xf32>
    %6 = tpu.matmul %4, %5, %cst {dimension_numbers = #tpu.dot_dimension_numbers<[1], [0], [0], [1], [0, 0, 1, 1], [], []>} : vector<32x32xf32>, vector<32x96xf32>, vector<32x96xf32> -> vector<32x96xf32>
    %7 = arith.addf %3, %6 : vector<32x96xf32>
    %c0_6 = arith.constant 0 : index
    %c0_7 = arith.constant 0 : index
    %8 = vector.load %arg7[%c0_6, %c0_7] : memref<32x96xf32, #tpu.memory_space<vmem>>, vector<32x96xf32>
    tpu.vector_store %arg7[%c0_6, %c0_7], %7 {strides = array<i32>} : memref<32x96xf32, #tpu.memory_space<vmem>>, vector<32x96xf32>,
    %c0_i32_8 = arith.constant 0 : i32
    %9 = arith.cmpi eq, %arg2, %c0_i32_8 : i32
    %10 = arith.extui %9 : i1 to i32
    %c0_i32_9 = arith.constant 0 : i32
    %11 = arith.cmpi ne, %10, %c0_i32_9 : i32
    scf.if %11 {
      %c0_10 = arith.constant 0 : index
      %c0_11 = arith.constant 0 : index
      %12 = vector.load %arg7[%c0_10, %c0_11] : memref<32x96xf32, #tpu.memory_space<vmem>>, vector<32x96xf32>
      %c0_12 = arith.constant 0 : index
      %c0_13 = arith.constant 0 : index
      %13 = vector.load %arg5[%c0_12, %c0_13] : memref<1x96xf32, #tpu.memory_space<vmem>>, vector<1x96xf32>
      %14 = vector.broadcast %13 : vector<1x96xf32> to vector<32x96xf32>
      %15 = arith.addf %12, %14 : vector<32x96xf32>
      %c0_14 = arith.constant 0 : index
      %c0_15 = arith.constant 0 : index
      %16 = vector.load %arg6[%c0_14, %c0_15] : memref<32x96xf32, #tpu.memory_space<vmem>>, vector<32x96xf32>
      tpu.vector_store %arg6[%c0_14, %c0_15], %15 {strides = array<i32>} : memref<32x96xf32, #tpu.memory_space<vmem>>, vector<32x96xf32>,
    } else {
    }
    return
  }
  func.func @transform_0(%arg0: i32, %arg1: i32, %arg2: i32) -> (i32, i32) {
    %c0_i32 = arith.constant 0 : i32
    return %arg0, %arg2 : i32, i32
  }
  func.func @transform_1(%arg0: i32, %arg1: i32, %arg2: i32) -> (i32, i32) {
    %c0_i32 = arith.constant 0 : i32
    return %arg2, %arg1 : i32, i32
  }
  func.func @transform_2(%arg0: i32, %arg1: i32, %arg2: i32) -> (i32, i32) {
    %c0_i32 = arith.constant 0 : i32
    %c0_i32_0 = arith.constant 0 : i32
    return %c0_i32, %arg1 : i32, i32
  }
  func.func @transform_3(%arg0: i32, %arg1: i32, %arg2: i32) -> (i32, i32) {
    %c0_i32 = arith.constant 0 : i32
    return %arg0, %arg1 : i32, i32
  }
}

</mosaic_0001>

<llo_original>
// kernel: tpu_custom_call.1
$region0: #{tpu_custom_call.1}
  #allocation0 [shape = 'u32[]', space=smem, size = 0x4, offset = 0x4, fixed_abs, tag = 'smem constant byte address 0x4 - core index']
  #allocation1 [shape = 'u32[72,128]{1,0:T(1,128)}', space=vmem, size = 0x9000, scoped, tag = 'internal scratch']
  #allocation2 [shape = 'f32[32,96]{1,0:T(8,128)}', space=vmem, size = 0x4000, scoped, tag = 'scratch operand']
  %s0 = inlined_call_operand.hbm [shape: f32[32,32], index: 0, kind: input, shape index: {}]
  %s1 = inlined_call_operand.hbm [shape: f32[32,96], index: 1, kind: input, shape index: {}]
  %s2 = inlined_call_operand.vmem [shape: f32[1,96], index: 2, kind: input, shape index: {}]
  %s3 = inlined_call_operand.hbm [shape: f32[32,96], index: 3, kind: output, shape index: {}]
  %s4 = sld [smem:[#allocation0]]
  $region38: #{tpu_custom_call.1} parent=0
    _
  %s6 = ssub.s32 1, %s4
  %s7 = scalar_select 0, %s6, %s4
  $region1: #{tpu_custom_call.1} parent=0
    #allocation3 [shape = 'u8[16384]{0}', space=vmem, size = 0x4000, scoped, tag = 'input window, operand 0, single buffered']
    #allocation4 [shape = 's32[1]{0}', space=sflag, size = 0x4, scoped, tag = 'scoped memory for tpu_custom_call.1']
    #allocation5 [shape = 's32[1]{0}', space=sflag, size = 0x4, scoped, tag = 'scoped memory for tpu_custom_call.1']
    #allocation6 [shape = 'u8[16384]{0}', space=vmem, size = 0x4000, scoped, tag = 'input window, operand 1, single buffered']
    #allocation7 [shape = 's32[1]{0}', space=sflag, size = 0x4, scoped, tag = 'scoped memory for tpu_custom_call.1']
    #allocation8 [shape = 'u8[16384]{0}', space=vmem, size = 0x4000, scoped, tag = 'output window, operand 0, single buffered']
    %8 = vsyncpa [#allocation4], 0
    %9 = vsyncpa [#allocation7], 0
    %10 = vsyncpa [#allocation5], 0
    // Predicated region
    $region2: #{tpu_custom_call.1} parent=1 // pred_check
      _
    $region3: #{tpu_custom_call.1} parent=1 // pred_check_branch
      %12 = sbr.rel (0) target = $region5
    $region4: #{tpu_custom_call.1} parent=1 // pred_region
      %14 = vsyncadd [#allocation4], 0
      %s15 = sshll.u32 %s0, 4
      %s16 = int_to_ptr.hbm [resolvable:$true] %s15
      %s17 = sshll.u32 [#allocation3], 4
      %s18 = int_to_ptr.vmem [resolvable:$true] %s17
      %23 = dma.hbm_to_vmem [thread:$0]  %s16, 512, %s18, [#allocation4], 128, 128, 8
    $region5: #{tpu_custom_call.1} parent=1 // pred_fallthru
      _
    // Predicated region
    $region6: #{tpu_custom_call.1} parent=1 // pred_check
      _
    $region7: #{tpu_custom_call.1} parent=1 // pred_check_branch
      %25 = sbr.rel (0) target = $region9
    $region8: #{tpu_custom_call.1} parent=1 // pred_region
      %27 = vsyncadd [#allocation7], 0
      %s28 = sshll.u32 %s1, 4
      %s29 = int_to_ptr.hbm [resolvable:$true] %s28
      %s30 = sshll.u32 [#allocation6], 4
      %s31 = int_to_ptr.vmem [resolvable:$true] %s30
      %36 = dma.hbm_to_vmem [thread:$0]  %s29, 512, %s31, [#allocation7], 128, 128, 8
    $region9: #{tpu_custom_call.1} parent=1 // pred_fallthru
      _
    // Predicated region
    $region10: #{tpu_custom_call.1} parent=1 // pred_check
      _
    $region11: #{tpu_custom_call.1} parent=1 // pred_check_branch
      %38 = sbr.rel (0) target = $region13
    $region12: #{tpu_custom_call.1} parent=1 // pred_region
      _
    $region13: #{tpu_custom_call.1} parent=1 // pred_fallthru
      _
    // Predicated region
    $region14: #{tpu_custom_call.1} parent=1 // pred_check
      _
    $region15: #{tpu_custom_call.1} parent=1 // pred_check_branch
      %40 = sbr.rel (0) target = $region17
    $region16: #{tpu_custom_call.1} parent=1 // pred_region
      %42 = dma.done [#allocation4], 512
    $region17: #{tpu_custom_call.1} parent=1 // pred_fallthru
      _
    // Predicated region
    $region18: #{tpu_custom_call.1} parent=1 // pred_check
      _
    $region19: #{tpu_custom_call.1} parent=1 // pred_check_branch
      %44 = sbr.rel (0) target = $region21
    $region20: #{tpu_custom_call.1} parent=1 // pred_region
      %46 = dma.done [#allocation7], 512
    $region21: #{tpu_custom_call.1} parent=1 // pred_fallthru
      _
    %p47 = scmp.eq.s32.totalorder 0, 0
    // Predicated region
    $region22: #{tpu_custom_call.1} parent=1 // pred_check
      %p48 = pneg %p47
    $region23: #{tpu_custom_call.1} parent=1 // pred_check_branch
      %50 = sbr.rel (%p48) target = $region25
    $region24: #{tpu_custom_call.1} parent=1 // pred_region
      %vm51 = vcmask 785408
      %52 = vst.msk [vmem:[#allocation2] sm:$0xff] %vm51, 0.0
      %53 = vst.msk [vmem:[#allocation2 + $0x8] sm:$0xff] %vm51, 0.0
      %54 = vst.msk [vmem:[#allocation2 + $0x10] sm:$0xff] %vm51, 0.0
      %55 = vst.msk [vmem:[#allocation2 + $0x18] sm:$0xff] %vm51, 0.0
    $region25: #{tpu_custom_call.1} parent=1 // pred_fallthru
      _
    %v56 = vld [vmem:[#allocation2] sm:$0xff]
    %v57 = vld [vmem:[#allocation2 + $0x8] sm:$0xff]
    %v58 = vld [vmem:[#allocation2 + $0x10] sm:$0xff]
    %v59 = vld [vmem:[#allocation2 + $0x18] sm:$0xff]
    %v60 = vld [vmem:[#allocation3] sm:$0xff]
    %v61 = vld [vmem:[#allocation3 + $0x8] sm:$0xff]
    %v62 = vld [vmem:[#allocation3 + $0x10] sm:$0xff]
    %v63 = vld [vmem:[#allocation3 + $0x18] sm:$0xff]
    %v64 = vld [vmem:[#allocation6] sm:$0xff]
    %v65 = vld [vmem:[#allocation6 + $0x8] sm:$0xff]
    %v66 = vld [vmem:[#allocation6 + $0x10] sm:$0xff]
    %v67 = vld [vmem:[#allocation6 + $0x18] sm:$0xff]
    %vm68 = vcmask 261120
    %v70 = vsel %vm68, %v60, 0
    %v73 = vsel %vm68, %v61, 0
    %v76 = vsel %vm68, %v62, 0
    %v79 = vsel %vm68, %v63, 0
    %81 = vmatpush.msra.mxu0 0.0
    %82 = vmatpush.msra.mxu0 0.0
    %83 = vmatpush.msra.mxu0 0.0
    %84 = vmatpush.msra.mxu0 0.0
    %85 = vmatpush.msra.mxu0 0.0
    %86 = vmatpush.msra.mxu0 0.0
    %87 = vmatpush.msra.mxu0 0.0
    %88 = vmatpush.msra.mxu0 0.0
    %89 = vmatpush.msra.mxu0 0.0
    %90 = vmatpush.msra.mxu0 0.0
    %91 = vmatpush.msra.mxu0 0.0
    %92 = vmatpush.msra.mxu0 0.0
    %93 = vmatpush.msra.mxu0 %v67
    %94 = vmatpush.msra.mxu0 %v66
    %95 = vmatpush.msra.mxu0 %v65
    %96 = vmatpush.msra.mxu0 %v64
    %97 = vmatmul.f32.gmra.mxu0 %v70
    %v98 = vpop.f32.mrf.mxu0
    %v99 = vadd.f32 0.0, %v98
    %100 = vmatmul.f32.gmra.mxu0 %v73
    %v101 = vpop.f32.mrf.mxu0
    %v102 = vadd.f32 0.0, %v101
    %103 = vmatmul.f32.gmra.mxu0 %v76
    %v104 = vpop.f32.mrf.mxu0
    %v105 = vadd.f32 0.0, %v104
    %106 = vmatmul.f32.gmra.mxu0 %v79
    %v107 = vpop.f32.mrf.mxu0
    %v108 = vadd.f32 0.0, %v107
    %109 = vdwg.mxu0
    %v110 = vadd.f32 %v56, %v99
    %v111 = vadd.f32 %v57, %v102
    %v112 = vadd.f32 %v58, %v105
    %v113 = vadd.f32 %v59, %v108
    %vm114 = vcmask 785408
    %115 = vst.msk [vmem:[#allocation2] sm:$0xff] %vm114, %v110
    %116 = vst.msk [vmem:[#allocation2 + $0x8] sm:$0xff] %vm114, %v111
    %117 = vst.msk [vmem:[#allocation2 + $0x10] sm:$0xff] %vm114, %v112
    %118 = vst.msk [vmem:[#allocation2 + $0x18] sm:$0xff] %vm114, %v113
    // Predicated region
    $region26: #{tpu_custom_call.1} parent=1 // pred_check
      %p119 = pneg %p47
    $region27: #{tpu_custom_call.1} parent=1 // pred_check_branch
      %121 = sbr.rel (%p119) target = $region29
    $region28: #{tpu_custom_call.1} parent=1 // pred_region
      %v122 = vld [vmem:[#allocation2] sm:$0xff]
      %v123 = vld [vmem:[#allocation2 + $0x8] sm:$0xff]
      %v124 = vld [vmem:[#allocation2 + $0x10] sm:$0xff]
      %v125 = vld [vmem:[#allocation2 + $0x18] sm:$0xff]
      %v126 = vld [vmem:[%s2] sm:$0x1]
      %v128 = vperm.slane %v126, 0
      %v130 = vadd.f32 %v122, %v128
      %v131 = vadd.f32 %v123, %v128
      %v132 = vadd.f32 %v124, %v128
      %v133 = vadd.f32 %v125, %v128
      %134 = vst.msk [vmem:[#allocation8] sm:$0xff] %vm114, %v130
      %135 = vst.msk [vmem:[#allocation8 + $0x8] sm:$0xff] %vm114, %v131
      %136 = vst.msk [vmem:[#allocation8 + $0x10] sm:$0xff] %vm114, %v132
      %137 = vst.msk [vmem:[#allocation8 + $0x18] sm:$0xff] %vm114, %v133
    $region29: #{tpu_custom_call.1} parent=1 // pred_fallthru
      _
    // Predicated region
    $region30: #{tpu_custom_call.1} parent=1 // pred_check
      _
    $region31: #{tpu_custom_call.1} parent=1 // pred_check_branch
      %139 = sbr.rel (0) target = $region33
    $region32: #{tpu_custom_call.1} parent=1 // pred_region
      %141 = vsyncadd [#allocation5], 0
      %s142 = sshll.u32 [#allocation8], 4
      %s143 = int_to_ptr.vmem [resolvable:$true] %s142
      %s144 = sshll.u32 %s3, 4
      %s145 = int_to_ptr.hbm [resolvable:$true] %s144
      %150 = dma.vmem_to_hbm [thread:$0]  %s143, 512, %s145, [#allocation5], 128, 128, 8
    $region33: #{tpu_custom_call.1} parent=1 // pred_fallthru
      _
    // Predicated region
    $region34: #{tpu_custom_call.1} parent=1 // pred_check
      _
    $region35: #{tpu_custom_call.1} parent=1 // pred_check_branch
      %152 = sbr.rel (0) target = $region37
    $region36: #{tpu_custom_call.1} parent=1 // pred_region
      %154 = dma.done [#allocation5], 512
    $region37: #{tpu_custom_call.1} parent=1 // pred_fallthru
      _
    %155 = vsyncpa [#allocation4], 1
    %156 = vsyncpa [#allocation7], 1
    %157 = vsyncpa [#allocation5], 1

</llo_original>
